<compile_context>
chip_gen: v5e
topology: v5e:2x2
jax: 0.10.0
libtpu: 0.0.40
codegen_flags: <defaults>
</compile_context>

<pallas_src>
import functools

import jax
import jax.numpy as jnp
import numpy as np
from jax.experimental import pallas as pl
from jax.experimental.pallas import tpu as pltpu

# ---------------- configuration (small, consistent with the module) ----------
B = 2          # batch
S = 8          # sequence length
MODEL_DIM = 32
HEAD_NUM = 2
ATTEN_DIM = 8
HA = HEAD_NUM * ATTEN_DIM
RESIDUAL = True
LN_EPS = 1e-5


# ------------------------------ kernel ---------------------------------------
def mix_attention_kernel(x_ref, w_ref, wfc_ref, misc_ref, out_ref, *,
                         residual, batch, seq, head_num, atten_dim):
  model_dim = out_ref.shape[-1]
  a = atten_dim
  a3 = 3 * a
  inv_sqrt_a = float(1.0 / np.sqrt(a))

  bfc = misc_ref[0:1, :]      # (1, D)
  gamma = misc_ref[1:2, :]    # (1, D)
  beta = misc_ref[2:3, :]     # (1, D)

  x = x_ref[...]                          # (B*S, KDIM) activation slab
  resid = x[:, :model_dim]                # first block is q_data (the residual)

  # ONE fused projection matmul for all of {Q, K, V} x heads x batches.
  # Columns: [Q_h0 | Q_h1 | K_h0 | K_h1 | V_h0 | V_h1], Q/K blocks are 3A wide.
  proj = jnp.dot(x, w_ref[...], preferred_element_type=jnp.float32)  # (B*S, 112)

  qbase = 0
  kbase = head_num * a3
  vbase = 2 * head_num * a3

  # Scores for every (b, h): q_bh (S,3A) contracted with k_bh (S,3A) over 3A gives
  # Qd Kd^T + Qp Qp^T + Qt Kt^T in one dot.  Stack the 4 tiles on sublanes.
  tiles = []
  for b in range(batch):                       # static loops, B and H are tiny
    pb = proj[b * seq:(b + 1) * seq, :]
    for h in range(head_num):
      q = pb[:, qbase + h * a3: qbase + (h + 1) * a3]
      k = pb[:, kbase + h * a3: kbase + (h + 1) * a3]
      tiles.append(jax.lax.dot_general(
          q, k, (((1,), (1,)), ((), ())), preferred_element_type=jnp.float32))
  scores = jnp.concatenate(tiles, axis=0) * inv_sqrt_a          # (B*H*S, S)

  # ONE fused softmax over all (b, h) tiles (each row only contains its own keys).
  m = jnp.max(scores, axis=-1, keepdims=True)
  e = jnp.exp(scores - m)
  denom = jnp.sum(e, axis=-1, keepdims=True)
  attn = e * pl.reciprocal(denom, approx=False)

  # ctx per (b, h); concat heads on lanes, batches on sublanes -> (B*S, H*A).
  rows = []
  for b in range(batch):
    pb = proj[b * seq:(b + 1) * seq, :]
    per_head = []
    for h in range(head_num):
      v = pb[:, vbase + h * a: vbase + (h + 1) * a]
      i = b * head_num + h
      attn_bh = attn[i * seq:(i + 1) * seq, :]
      per_head.append(jnp.dot(attn_bh, v, preferred_element_type=jnp.float32))
    rows.append(jnp.concatenate(per_head, axis=-1))             # (S, H*A)
  ctx = jnp.concatenate(rows, axis=0)                           # (B*S, H*A)

  # ONE output projection (+ bias, residual).
  out = jnp.dot(ctx, wfc_ref[...], preferred_element_type=jnp.float32) + bfc
  if residual:
    out = out + resid

  # ONE LayerNorm over model_dim (biased variance, eps=1e-5, affine) + ONE store.
  mean = jnp.mean(out, axis=-1, keepdims=True)
  var = jnp.mean((out - mean) ** 2, axis=-1, keepdims=True)
  normed = (out - mean) * jax.lax.rsqrt(var + LN_EPS)
  out_ref[...] = normed * gamma + beta


# ------------------- one-time weight packing (outside the hot path) ----------
def pack_params(params, *, model_dim, head_num, atten_dim):
  """Pack the module weights into lane-dense slabs. Call ONCE at init, not per forward."""
  d = model_dim
  a = atten_dim
  a3 = 3 * a
  raw = 6 * d + 1                                   # 6 feature blocks + 1 bias column
  kdim = ((raw + 127) // 128) * 128                 # contraction dim, padded to 128
  oqd, oqp, oqt, okd, okt, ovt, obias = 0, d, 2 * d, 3 * d, 4 * d, 5 * d, 6 * d
  ncols = head_num * (a3 + a3 + a)                  # 112 for H=2, A=8

  P = {k: np.asarray(v) for k, v in params.items()}
  w = np.zeros((kdim, ncols), np.float32)
  qbase, kbase, vbase = 0, head_num * a3, 2 * head_num * a3

  for h in range(head_num):
    hc = slice(h * a, (h + 1) * a)
    cq = qbase + h * a3
    ck = kbase + h * a3
    cv = vbase + h * a
    # Q side: [data | period | time] block-diagonal + bias row
    w[oqd:oqd + d, cq + 0:cq + a] = P["wqd"][:, hc]
    w[oqp:oqp + d, cq + a:cq + 2 * a] = P["wqp"][:, hc]
    w[oqt:oqt + d, cq + 2 * a:cq + 3 * a] = P["wqt"][:, hc]
    w[obias, cq + 0:cq + a] = P["bqd"][0, hc]
    w[obias, cq + a:cq + 2 * a] = P["bqp"][0, hc]
    w[obias, cq + 2 * a:cq + 3 * a] = P["bqt"][0, hc]
    # K side: period block re-uses W_Q_period on q_period (scores_period = Qp Qp^T)
    w[okd:okd + d, ck + 0:ck + a] = P["wkd"][:, hc]
    w[oqp:oqp + d, ck + a:ck + 2 * a] = P["wqp"][:, hc]
    w[okt:okt + d, ck + 2 * a:ck + 3 * a] = P["wkt"][:, hc]
    w[obias, ck + 0:ck + a] = P["bkd"][0, hc]
    w[obias, ck + a:ck + 2 * a] = P["bqp"][0, hc]
    w[obias, ck + 2 * a:ck + 3 * a] = P["bkt"][0, hc]
    # V
    w[ovt:ovt + d, cv:cv + a] = P["wvt"][:, hc]
    w[obias, cv:cv + a] = P["bvt"][0, hc]

  misc = np.concatenate([P["bfc"], P["gamma"], P["beta"]], axis=0)   # (3, D)
  return jnp.asarray(w), jnp.asarray(P["wfc"]), jnp.asarray(misc)


# ------------------------------ per-call wrapper ------------------------------
@functools.partial(jax.jit, static_argnames=("head_num", "atten_dim", "residual"))
def mix_attention(q_data, q_period, q_time, k_data, k_period, k_time, v_time,
                  w_big, wfc, misc, *, head_num, atten_dim, residual):
  # K_period is projected-then-ignored in the reference forward; drop it entirely.
  del k_period
  b, s, d = q_data.shape
  kdim = w_big.shape[0]
  raw = 6 * d + 1

  # Activation slab: [qd | qp | qt | kd | kt | vt | 1 | zero-pad]  (zero pad is required
  # so the padded lanes contribute nothing to the fused contraction).
  ones = jnp.ones((b, s, 1), jnp.float32)
  x = jnp.concatenate([q_data, q_period, q_time, k_data, k_time, v_time, ones],
                      axis=-1)
  x = jnp.pad(x, ((0, 0), (0, 0), (0, kdim - raw))).reshape(b * s, kdim)

  kernel = functools.partial(
      mix_attention_kernel, residual=residual, batch=b, seq=s,
      head_num=head_num, atten_dim=atten_dim)

  vmem = pl.BlockSpec(memory_space=pltpu.MemorySpace.VMEM)   # whole-array, VMEM-resident

  out = pl.pallas_call(
      kernel,
      out_shape=jax.ShapeDtypeStruct((b * s, d), jnp.float32),
      in_specs=[vmem, vmem, vmem, vmem],
      out_specs=vmem,
  )(x, w_big, wfc, misc)
  return out.reshape(b, s, d)


# ---------------- pure-JAX reference (mirrors the PyTorch forward) -----------
def mix_attention_ref(q_data, q_period, q_time, k_data, k_period, k_time, v_time,
                      params, *, head_num, atten_dim, residual):
  del k_period  # projected then unused in the reference forward

  def proj(x, w, bias):
    return x @ w + bias[0]

  def split_heads(x):  # (B,S,H*A) -> (B,H,S,A)
    b_, s_, _ = x.shape
    return x.reshape(b_, s_, head_num, atten_dim).transpose(0, 2, 1, 3)

  resid = q_data
  Qd = split_heads(proj(q_data, params["wqd"], params["bqd"]))
  Qp = split_heads(proj(q_period, params["wqp"], params["bqp"]))
  Qt = split_heads(proj(q_time, params["wqt"], params["bqt"]))
  Kd = split_heads(proj(k_data, params["wkd"], params["bkd"]))
  Kt = split_heads(proj(k_time, params["wkt"], params["bkt"]))
  Vt = split_heads(proj(v_time, params["wvt"], params["bvt"]))

  scale = 1.0 / np.sqrt(atten_dim)
  scores = (jnp.einsum("bhsa,bhta->bhst", Qd, Kd)
            + jnp.einsum("bhsa,bhta->bhst", Qp, Qp)
            + jnp.einsum("bhsa,bhta->bhst", Qt, Kt)) * scale
  attn = jax.nn.softmax(scores, axis=-1)
  ctx = jnp.einsum("bhst,bhta->bhsa", attn, Vt)
  ctx = ctx.transpose(0, 2, 1, 3).reshape(q_data.shape[0], q_data.shape[1], -1)
  out = ctx @ params["wfc"] + params["bfc"][0]
  if residual:
    out = out + resid
  mean = out.mean(-1, keepdims=True)
  var = ((out - mean) ** 2).mean(-1, keepdims=True)
  return (out - mean) / jnp.sqrt(var + LN_EPS) * params["gamma"][0] + params["beta"][0]


def init_params(key):
  keys = jax.random.split(key, 16)
  names = ["qd", "qp", "qt", "kd", "kp", "kt", "vt"]
  params = {}
  scale = 1.0 / np.sqrt(MODEL_DIM)
  for i, n in enumerate(names):
    params[f"w{n}"] = jax.random.uniform(
        keys[2 * i], (MODEL_DIM, HA), jnp.float32, -scale, scale)
    params[f"b{n}"] = jax.random.uniform(
        keys[2 * i + 1], (1, HA), jnp.float32, -scale, scale)
  fc_scale = 1.0 / np.sqrt(HA)
  params["wfc"] = jax.random.uniform(keys[14], (HA, MODEL_DIM), jnp.float32,
                                     -fc_scale, fc_scale)
  params["bfc"] = jax.random.uniform(keys[15], (1, MODEL_DIM), jnp.float32,
                                     -fc_scale, fc_scale)
  params["gamma"] = jnp.ones((1, MODEL_DIM), jnp.float32)
  params["beta"] = jnp.zeros((1, MODEL_DIM), jnp.float32)
  return params


if __name__ == "__main__":
  key = jax.random.PRNGKey(0)
  pkey, *ikeys = jax.random.split(key, 9)
  params = init_params(pkey)

  # Pack the weight slabs ONCE (init-time), outside the per-call jitted path.
  w_big, wfc, misc = pack_params(params, model_dim=MODEL_DIM,
                                 head_num=HEAD_NUM, atten_dim=ATTEN_DIM)

  shapes = (B, S, MODEL_DIM)
  q_data = jax.random.normal(ikeys[0], shapes, jnp.float32)
  q_period = jax.random.normal(ikeys[1], shapes, jnp.float32)
  q_time = jax.random.normal(ikeys[2], shapes, jnp.float32)
  k_data = jax.random.normal(ikeys[3], shapes, jnp.float32)
  k_period = jax.random.normal(ikeys[4], shapes, jnp.float32)
  k_time = jax.random.normal(ikeys[5], shapes, jnp.float32)
  v_time = jax.random.normal(ikeys[6], shapes, jnp.float32)

  out = mix_attention(q_data, q_period, q_time, k_data, k_period, k_time,
                      v_time, w_big, wfc, misc, head_num=HEAD_NUM,
                      atten_dim=ATTEN_DIM, residual=RESIDUAL)
  out = jax.block_until_ready(out)

  ref = mix_attention_ref(q_data, q_period, q_time, k_data, k_period, k_time,
                          v_time, params, head_num=HEAD_NUM,
                          atten_dim=ATTEN_DIM, residual=RESIDUAL)
  np.testing.assert_allclose(np.asarray(out), np.asarray(ref),
                             rtol=1e-4, atol=1e-4)
  print("KERNEL_OK")
</pallas_src>

<mosaic_0001>
module attributes {stable_mosaic.version = 11 : i64} {
  func.func @mix_attention_kernel(%arg0: memref<16x256xf32, #tpu.memory_space<vmem>>, %arg1: memref<256x112xf32, #tpu.memory_space<vmem>>, %arg2: memref<16x32xf32, #tpu.memory_space<vmem>>, %arg3: memref<3x32xf32, #tpu.memory_space<vmem>>, %arg4: memref<16x32xf32, #tpu.memory_space<vmem>>) attributes {dimension_semantics = [], scalar_prefetch = 0 : i64, scratch_operands = 0 : i64, tpu.core_type = #tpu.core_type<tc>} {
    %c0 = arith.constant 0 : index
    %c0_0 = arith.constant 0 : index
    %0 = vector.load %arg3[%c0, %c0_0] : memref<3x32xf32, #tpu.memory_space<vmem>>, vector<1x32xf32>
    %c1 = arith.constant 1 : index
    %c0_1 = arith.constant 0 : index
    %1 = vector.load %arg3[%c1, %c0_1] : memref<3x32xf32, #tpu.memory_space<vmem>>, vector<1x32xf32>
    %c2 = arith.constant 2 : index
    %c0_2 = arith.constant 0 : index
    %2 = vector.load %arg3[%c2, %c0_2] : memref<3x32xf32, #tpu.memory_space<vmem>>, vector<1x32xf32>
    %c0_3 = arith.constant 0 : index
    %c0_4 = arith.constant 0 : index
    %3 = vector.load %arg0[%c0_3, %c0_4] : memref<16x256xf32, #tpu.memory_space<vmem>>, vector<16x256xf32>
    %4 = vector.extract_strided_slice %3 {offsets = [0, 0], sizes = [16, 32], strides = [1, 1]} : vector<16x256xf32> to vector<16x32xf32>
    %c0_5 = arith.constant 0 : index
    %c0_6 = arith.constant 0 : index
    %5 = vector.load %arg1[%c0_5, %c0_6] : memref<256x112xf32, #tpu.memory_space<vmem>>, vector<256x112xf32>
    %cst = arith.constant dense<0.000000e+00> : vector<16x112xf32>
    %6 = tpu.matmul %3, %5, %cst {dimension_numbers = #tpu.dot_dimension_numbers<[1], [0], [0], [1], [0, 0, 1, 1], [], []>} : vector<16x256xf32>, vector<256x112xf32>, vector<16x112xf32> -> vector<16x112xf32>
    %7 = vector.extract_strided_slice %6 {offsets = [0, 0], sizes = [8, 112], strides = [1, 1]} : vector<16x112xf32> to vector<8x112xf32>
    %8 = vector.extract_strided_slice %7 {offsets = [0, 0], sizes = [8, 24], strides = [1, 1]} : vector<8x112xf32> to vector<8x24xf32>
    %9 = vector.extract_strided_slice %7 {offsets = [0, 48], sizes = [8, 24], strides = [1, 1]} : vector<8x112xf32> to vector<8x24xf32>
    %cst_7 = arith.constant dense<0.000000e+00> : vector<8x8xf32>
    %10 = tpu.matmul %8, %9, %cst_7 {dimension_numbers = #tpu.dot_dimension_numbers<[1], [1], [0], [0], [0, 0, 1, 0], [], []>} : vector<8x24xf32>, vector<8x24xf32>, vector<8x8xf32> -> vector<8x8xf32>
    %11 = vector.extract_strided_slice %7 {offsets = [0, 24], sizes = [8, 24], strides = [1, 1]} : vector<8x112xf32> to vector<8x24xf32>
    %12 = vector.extract_strided_slice %7 {offsets = [0, 72], sizes = [8, 24], strides = [1, 1]} : vector<8x112xf32> to vector<8x24xf32>
    %cst_8 = arith.constant dense<0.000000e+00> : vector<8x8xf32>
    %13 = tpu.matmul %11, %12, %cst_8 {dimension_numbers = #tpu.dot_dimension_numbers<[1], [1], [0], [0], [0, 0, 1, 0], [], []>} : vector<8x24xf32>, vector<8x24xf32>, vector<8x8xf32> -> vector<8x8xf32>
    %14 = vector.extract_strided_slice %6 {offsets = [8, 0], sizes = [8, 112], strides = [1, 1]} : vector<16x112xf32> to vector<8x112xf32>
    %15 = vector.extract_strided_slice %14 {offsets = [0, 0], sizes = [8, 24], strides = [1, 1]} : vector<8x112xf32> to vector<8x24xf32>
    %16 = vector.extract_strided_slice %14 {offsets = [0, 48], sizes = [8, 24], strides = [1, 1]} : vector<8x112xf32> to vector<8x24xf32>
    %cst_9 = arith.constant dense<0.000000e+00> : vector<8x8xf32>
    %17 = tpu.matmul %15, %16, %cst_9 {dimension_numbers = #tpu.dot_dimension_numbers<[1], [1], [0], [0], [0, 0, 1, 0], [], []>} : vector<8x24xf32>, vector<8x24xf32>, vector<8x8xf32> -> vector<8x8xf32>
    %18 = vector.extract_strided_slice %14 {offsets = [0, 24], sizes = [8, 24], strides = [1, 1]} : vector<8x112xf32> to vector<8x24xf32>
    %19 = vector.extract_strided_slice %14 {offsets = [0, 72], sizes = [8, 24], strides = [1, 1]} : vector<8x112xf32> to vector<8x24xf32>
    %cst_10 = arith.constant dense<0.000000e+00> : vector<8x8xf32>
    %20 = tpu.matmul %18, %19, %cst_10 {dimension_numbers = #tpu.dot_dimension_numbers<[1], [1], [0], [0], [0, 0, 1, 0], [], []>} : vector<8x24xf32>, vector<8x24xf32>, vector<8x8xf32> -> vector<8x8xf32>
    %21 = tpu.concatenate %10, %13, %17, %20 in 0 : vector<8x8xf32>, vector<8x8xf32>, vector<8x8xf32>, vector<8x8xf32> -> vector<32x8xf32>
    %cst_11 = arith.constant 0.353553385 : f32
    %22 = vector.broadcast %cst_11 : f32 to vector<32x8xf32>
    %23 = arith.mulf %21, %22 : vector<32x8xf32>
    %cst_12 = arith.constant dense<0xFF800000> : vector<32xf32>
    %24 = vector.multi_reduction <maximumf>, %23, %cst_12 [1] : vector<32x8xf32> to vector<32xf32>
    %25 = vector.shape_cast %24 : vector<32xf32> to vector<32x1xf32>
    %26 = vector.broadcast %25 : vector<32x1xf32> to vector<32x8xf32>
    %27 = arith.subf %23, %26 : vector<32x8xf32>
    %28 = math.exp %27 : vector<32x8xf32>
    %cst_13 = arith.constant dense<0.000000e+00> : vector<32xf32>
    %29 = vector.multi_reduction <add>, %28, %cst_13 [1] : vector<32x8xf32> to vector<32xf32>
    %30 = vector.shape_cast %29 : vector<32xf32> to vector<32x1xf32>
    %31 = tpu.reciprocal %30 : vector<32x1xf32> -> vector<32x1xf32>
    %32 = vector.broadcast %31 : vector<32x1xf32> to vector<32x8xf32>
    %33 = arith.mulf %28, %32 : vector<32x8xf32>
    %34 = vector.extract_strided_slice %6 {offsets = [0, 0], sizes = [8, 112], strides = [1, 1]} : vector<16x112xf32> to vector<8x112xf32>
    %35 = vector.extract_strided_slice %34 {offsets = [0, 96], sizes = [8, 8], strides = [1, 1]} : vector<8x112xf32> to vector<8x8xf32>
    %36 = vector.extract_strided_slice %33 {offsets = [0, 0], sizes = [8, 8], strides = [1, 1]} : vector<32x8xf32> to vector<8x8xf32>
    %cst_14 = arith.constant dense<0.000000e+00> : vector<8x8xf32>
    %37 = tpu.matmul %36, %35, %cst_14 {dimension_numbers = #tpu.dot_dimension_numbers<[1], [0], [0], [1], [0, 0, 1, 1], [], []>} : vector<8x8xf32>, vector<8x8xf32>, vector<8x8xf32> -> vector<8x8xf32>
    %38 = vector.extract_strided_slice %34 {offsets = [0, 104], sizes = [8, 8], strides = [1, 1]} : vector<8x112xf32> to vector<8x8xf32>
    %39 = vector.extract_strided_slice %33 {offsets = [8, 0], sizes = [8, 8], strides = [1, 1]} : vector<32x8xf32> to vector<8x8xf32>
    %cst_15 = arith.constant dense<0.000000e+00> : vector<8x8xf32>
    %40 = tpu.matmul %39, %38, %cst_15 {dimension_numbers = #tpu.dot_dimension_numbers<[1], [0], [0], [1], [0, 0, 1, 1], [], []>} : vector<8x8xf32>, vector<8x8xf32>, vector<8x8xf32> -> vector<8x8xf32>
    %41 = tpu.concatenate %37, %40 in 1 : vector<8x8xf32>, vector<8x8xf32> -> vector<8x16xf32>
    %42 = vector.extract_strided_slice %6 {offsets = [8, 0], sizes = [8, 112], strides = [1, 1]} : vector<16x112xf32> to vector<8x112xf32>
    %43 = vector.extract_strided_slice %42 {offsets = [0, 96], sizes = [8, 8], strides = [1, 1]} : vector<8x112xf32> to vector<8x8xf32>
    %44 = vector.extract_strided_slice %33 {offsets = [16, 0], sizes = [8, 8], strides = [1, 1]} : vector<32x8xf32> to vector<8x8xf32>
    %cst_16 = arith.constant dense<0.000000e+00> : vector<8x8xf32>
    %45 = tpu.matmul %44, %43, %cst_16 {dimension_numbers = #tpu.dot_dimension_numbers<[1], [0], [0], [1], [0, 0, 1, 1], [], []>} : vector<8x8xf32>, vector<8x8xf32>, vector<8x8xf32> -> vector<8x8xf32>
    %46 = vector.extract_strided_slice %42 {offsets = [0, 104], sizes = [8, 8], strides = [1, 1]} : vector<8x112xf32> to vector<8x8xf32>
    %47 = vector.extract_strided_slice %33 {offsets = [24, 0], sizes = [8, 8], strides = [1, 1]} : vector<32x8xf32> to vector<8x8xf32>
    %cst_17 = arith.constant dense<0.000000e+00> : vector<8x8xf32>
    %48 = tpu.matmul %47, %46, %cst_17 {dimension_numbers = #tpu.dot_dimension_numbers<[1], [0], [0], [1], [0, 0, 1, 1], [], []>} : vector<8x8xf32>, vector<8x8xf32>, vector<8x8xf32> -> vector<8x8xf32>
    %49 = tpu.concatenate %45, %48 in 1 : vector<8x8xf32>, vector<8x8xf32> -> vector<8x16xf32>
    %50 = tpu.concatenate %41, %49 in 0 : vector<8x16xf32>, vector<8x16xf32> -> vector<16x16xf32>
    %c0_18 = arith.constant 0 : index
    %c0_19 = arith.constant 0 : index
    %51 = vector.load %arg2[%c0_18, %c0_19] : memref<16x32xf32, #tpu.memory_space<vmem>>, vector<16x32xf32>
    %cst_20 = arith.constant dense<0.000000e+00> : vector<16x32xf32>
    %52 = tpu.matmul %50, %51, %cst_20 {dimension_numbers = #tpu.dot_dimension_numbers<[1], [0], [0], [1], [0, 0, 1, 1], [], []>} : vector<16x16xf32>, vector<16x32xf32>, vector<16x32xf32> -> vector<16x32xf32>
    %53 = vector.broadcast %0 : vector<1x32xf32> to vector<16x32xf32>
    %54 = arith.addf %52, %53 : vector<16x32xf32>
    %55 = arith.addf %54, %4 : vector<16x32xf32>
    %cst_21 = arith.constant dense<0.000000e+00> : vector<16xf32>
    %56 = vector.multi_reduction <add>, %55, %cst_21 [1] : vector<16x32xf32> to vector<16xf32>
    %57 = vector.shape_cast %56 : vector<16xf32> to vector<16x1xf32>
    %cst_22 = arith.constant 3.200000e+01 : f32
    %58 = vector.broadcast %cst_22 : f32 to vector<16x1xf32>
    %59 = arith.divf %57, %58 : vector<16x1xf32>
    %60 = vector.broadcast %59 : vector<16x1xf32> to vector<16x32xf32>
    %61 = arith.subf %55, %60 : vector<16x32xf32>
    %62 = arith.mulf %61, %61 : vector<16x32xf32>
    %cst_23 = arith.constant dense<0.000000e+00> : vector<16xf32>
    %63 = vector.multi_reduction <add>, %62, %cst_23 [1] : vector<16x32xf32> to vector<16xf32>
    %64 = vector.shape_cast %63 : vector<16xf32> to vector<16x1xf32>
    %cst_24 = arith.constant 3.200000e+01 : f32
    %65 = vector.broadcast %cst_24 : f32 to vector<16x1xf32>
    %66 = arith.divf %64, %65 : vector<16x1xf32>
    %67 = vector.broadcast %59 : vector<16x1xf32> to vector<16x32xf32>
    %68 = arith.subf %55, %67 : vector<16x32xf32>
    %cst_25 = arith.constant 9.99999974E-6 : f32
    %69 = vector.broadcast %cst_25 : f32 to vector<16x1xf32>
    %70 = arith.addf %66, %69 : vector<16x1xf32>
    %71 = math.rsqrt %70 : vector<16x1xf32>
    %72 = vector.broadcast %71 : vector<16x1xf32> to vector<16x32xf32>
    %73 = arith.mulf %68, %72 : vector<16x32xf32>
    %74 = vector.broadcast %1 : vector<1x32xf32> to vector<16x32xf32>
    %75 = arith.mulf %73, %74 : vector<16x32xf32>
    %76 = vector.broadcast %2 : vector<1x32xf32> to vector<16x32xf32>
    %77 = arith.addf %75, %76 : vector<16x32xf32>
    %c0_26 = arith.constant 0 : index
    %c0_27 = arith.constant 0 : index
    %78 = vector.load %arg4[%c0_26, %c0_27] : memref<16x32xf32, #tpu.memory_space<vmem>>, vector<16x32xf32>
    tpu.vector_store %arg4[%c0_26, %c0_27], %77 {strides = array<i32>} : memref<16x32xf32, #tpu.memory_space<vmem>>, vector<16x32xf32>,
    return
  }
}

</mosaic_0001>

<llo_original>
// kernel: mix_attention.1
$region0: #{mix_attention.1}
  #allocation0 [shape = 'u32[]', space=smem, size = 0x4, offset = 0x4, fixed_abs, tag = 'smem constant byte address 0x4 - core index']
  #allocation1 [shape = 'u32[72,128]{1,0:T(1,128)}', space=vmem, size = 0x9000, scoped, tag = 'internal scratch']
  %s0 = inlined_call_operand.vmem [shape: f32[16,256], index: 0, kind: input, shape index: {}]
  %s1 = inlined_call_operand.vmem [shape: f32[256,112], index: 1, kind: input, shape index: {}]
  %s2 = inlined_call_operand.vmem [shape: f32[16,32], index: 2, kind: input, shape index: {}]
  %s3 = inlined_call_operand.vmem [shape: f32[3,32], index: 3, kind: input, shape index: {}]
  %s4 = inlined_call_operand.hbm [shape: f32[16,32], index: 4, kind: output, shape index: {}]
  %s5 = sld [smem:[#allocation0]]
  $region26: #{mix_attention.1} parent=0
    _
  %s7 = ssub.s32 1, %s5
  %s8 = scalar_select 0, %s7, %s5
  $region1: #{mix_attention.1} parent=0
    #allocation2 [shape = 'u8[8192]{0}', space=vmem, size = 0x2000, scoped, tag = 'output window, operand 0, single buffered']
    #allocation3 [shape = 's32[1]{0}', space=sflag, size = 0x4, scoped, tag = 'scoped memory for mix_attention.1']
    %9 = vsyncpa [#allocation3], 0
    // Predicated region
    $region2: #{mix_attention.1} parent=1 // pred_check
      _
    $region3: #{mix_attention.1} parent=1 // pred_check_branch
      %11 = sbr.rel (0) target = $region5
    $region4: #{mix_attention.1} parent=1 // pred_region
      _
    $region5: #{mix_attention.1} parent=1 // pred_fallthru
      _
    // Predicated region
    $region6: #{mix_attention.1} parent=1 // pred_check
      _
    $region7: #{mix_attention.1} parent=1 // pred_check_branch
      %13 = sbr.rel (0) target = $region9
    $region8: #{mix_attention.1} parent=1 // pred_region
      _
    $region9: #{mix_attention.1} parent=1 // pred_fallthru
      _
    // Predicated region
    $region10: #{mix_attention.1} parent=1 // pred_check
      _
    $region11: #{mix_attention.1} parent=1 // pred_check_branch
      %15 = sbr.rel (0) target = $region13
    $region12: #{mix_attention.1} parent=1 // pred_region
      _
    $region13: #{mix_attention.1} parent=1 // pred_fallthru
      _
    // Predicated region
    $region14: #{mix_attention.1} parent=1 // pred_check
      _
    $region15: #{mix_attention.1} parent=1 // pred_check_branch
      %17 = sbr.rel (0) target = $region17
    $region16: #{mix_attention.1} parent=1 // pred_region
      _
    $region17: #{mix_attention.1} parent=1 // pred_fallthru
      _
    %v18 = vld [vmem:[%s3] sm:$0x1]
    %v19 = vld [vmem:[%s3 + $0x1] sm:$0x1]
    %v20 = vld [vmem:[%s3 + $0x2] sm:$0x1]
    %v21 = vld [vmem:[%s0] sm:$0xff]
    %v22 = vld [vmem:[%s0 + $0x8] sm:$0xff]
    %v23 = vld [vmem:[%s0 + $0x10] sm:$0xff]
    %v24 = vld [vmem:[%s0 + $0x18] sm:$0xff]
    %v25 = vld [vmem:[%s1] sm:$0xff]
    %v26 = vld [vmem:[%s1 + $0x8] sm:$0xff]
    %v27 = vld [vmem:[%s1 + $0x10] sm:$0xff]
    %v28 = vld [vmem:[%s1 + $0x18] sm:$0xff]
    %v29 = vld [vmem:[%s1 + $0x20] sm:$0xff]
    %v30 = vld [vmem:[%s1 + $0x28] sm:$0xff]
    %v31 = vld [vmem:[%s1 + $0x30] sm:$0xff]
    %v32 = vld [vmem:[%s1 + $0x38] sm:$0xff]
    %v33 = vld [vmem:[%s1 + $0x40] sm:$0xff]
    %v34 = vld [vmem:[%s1 + $0x48] sm:$0xff]
    %v35 = vld [vmem:[%s1 + $0x50] sm:$0xff]
    %v36 = vld [vmem:[%s1 + $0x58] sm:$0xff]
    %v37 = vld [vmem:[%s1 + $0x60] sm:$0xff]
    %v38 = vld [vmem:[%s1 + $0x68] sm:$0xff]
    %v39 = vld [vmem:[%s1 + $0x70] sm:$0xff]
    %v40 = vld [vmem:[%s1 + $0x78] sm:$0xff]
    %v41 = vld [vmem:[%s1 + $0x80] sm:$0xff]
    %v42 = vld [vmem:[%s1 + $0x88] sm:$0xff]
    %v43 = vld [vmem:[%s1 + $0x90] sm:$0xff]
    %v44 = vld [vmem:[%s1 + $0x98] sm:$0xff]
    %v45 = vld [vmem:[%s1 + $0xa0] sm:$0xff]
    %v46 = vld [vmem:[%s1 + $0xa8] sm:$0xff]
    %v47 = vld [vmem:[%s1 + $0xb0] sm:$0xff]
    %v48 = vld [vmem:[%s1 + $0xb8] sm:$0xff]
    %v49 = vld [vmem:[%s1 + $0xc0] sm:$0xff]
    %v50 = vld [vmem:[%s1 + $0xc8] sm:$0xff]
    %v51 = vld [vmem:[%s1 + $0xd0] sm:$0xff]
    %v52 = vld [vmem:[%s1 + $0xd8] sm:$0xff]
    %v53 = vld [vmem:[%s1 + $0xe0] sm:$0xff]
    %v54 = vld [vmem:[%s1 + $0xe8] sm:$0xff]
    %v55 = vld [vmem:[%s1 + $0xf0] sm:$0xff]
    %v56 = vld [vmem:[%s1 + $0xf8] sm:$0xff]
    %57 = vmatpush.msra.mxu0 %v40
    %58 = vmatpush.msra.mxu0 %v39
    %59 = vmatpush.msra.mxu0 %v38
    %60 = vmatpush.msra.mxu0 %v37
    %61 = vmatpush.msra.mxu0 %v36
    %62 = vmatpush.msra.mxu0 %v35
    %63 = vmatpush.msra.mxu0 %v34
    %64 = vmatpush.msra.mxu0 %v33
    %65 = vmatpush.msra.mxu0 %v32
    %66 = vmatpush.msra.mxu0 %v31
    %67 = vmatpush.msra.mxu0 %v30
    %68 = vmatpush.msra.mxu0 %v29
    %69 = vmatpush.msra.mxu0 %v28
    %70 = vmatpush.msra.mxu0 %v27
    %71 = vmatpush.msra.mxu0 %v26
    %72 = vmatpush.msra.mxu0 %v25
    %73 = vmatmul.f32.gmra.mxu0 %v21
    %v74 = vpop.f32.mrf.mxu0
    %v75 = vadd.f32 0.0, %v74
    %76 = vmatmul.f32.gmra.mxu0 %v23
    %v77 = vpop.f32.mrf.mxu0
    %v78 = vadd.f32 0.0, %v77
    %79 = vdwg.mxu0
    %80 = vmatpush.msra.mxu0 %v56
    %81 = vmatpush.msra.mxu0 %v55
    %82 = vmatpush.msra.mxu0 %v54
    %83 = vmatpush.msra.mxu0 %v53
    %84 = vmatpush.msra.mxu0 %v52
    %85 = vmatpush.msra.mxu0 %v51
    %86 = vmatpush.msra.mxu0 %v50
    %87 = vmatpush.msra.mxu0 %v49
    %88 = vmatpush.msra.mxu0 %v48
    %89 = vmatpush.msra.mxu0 %v47
    %90 = vmatpush.msra.mxu0 %v46
    %91 = vmatpush.msra.mxu0 %v45
    %92 = vmatpush.msra.mxu0 %v44
    %93 = vmatpush.msra.mxu0 %v43
    %94 = vmatpush.msra.mxu0 %v42
    %95 = vmatpush.msra.mxu0 %v41
    %96 = vmatmul.f32.gmra.mxu0 %v22
    %v97 = vpop.f32.mrf.mxu0
    %v98 = vadd.f32 %v75, %v97
    %99 = vmatmul.f32.gmra.mxu0 %v24
    %v100 = vpop.f32.mrf.mxu0
    %v101 = vadd.f32 %v78, %v100
    %102 = vdwg.mxu0
    %104 = vrot.lane.b32.xlu0 %v98, 80
    %v105 = vpop.permute.xlu0 %104
    %vm106 = vcmask 195584
    %v107 = vsel %vm106, %v98, 0
    %v109 = vsel %vm106, %v105, 0
    %111 = vmatpush.xpose.msra.mxu0 0.0
    %112 = vmatpush.xpose.msra.mxu0 0.0
    %113 = vmatpush.xpose.msra.mxu0 0.0
    %114 = vmatpush.xpose.msra.mxu0 0.0
    %115 = vmatpush.xpose.msra.mxu0 0.0
    %116 = vmatpush.xpose.msra.mxu0 0.0
    %117 = vmatpush.xpose.msra.mxu0 0.0
    %118 = vmatpush.xpose.msra.mxu0 0.0
    %119 = vmatpush.xpose.msra.mxu0 0.0
    %120 = vmatpush.xpose.msra.mxu0 0.0
    %121 = vmatpush.xpose.msra.mxu0 0.0
    %122 = vmatpush.xpose.msra.mxu0 0.0
    %123 = vmatpush.xpose.msra.mxu0 0.0
    %124 = vmatpush.xpose.msra.mxu0 0.0
    %125 = vmatpush.xpose.msra.mxu0 0.0
    %126 = vmatpush.xpose.msra.mxu0 %v109
    %127 = vmatmul.f32.gmra.mxu0 %v107
    %v128 = vpop.f32.mrf.mxu0
    %v129 = vadd.f32 0.0, %v128
    %130 = vdwg.mxu0
    %131 = vrot.lane.b32.xlu0 %v98, 104
    %v132 = vpop.permute.xlu0 %131
    %133 = vrot.lane.b32.xlu0 %v98, 56
    %v134 = vpop.permute.xlu0 %133
    %v135 = vsel %vm106, %v132, 0
    %v137 = vsel %vm106, %v134, 0
    %139 = vmatpush.xpose.msra.mxu0 0.0
    %140 = vmatpush.xpose.msra.mxu0 0.0
    %141 = vmatpush.xpose.msra.mxu0 0.0
    %142 = vmatpush.xpose.msra.mxu0 0.0
    %143 = vmatpush.xpose.msra.mxu0 0.0
    %144 = vmatpush.xpose.msra.mxu0 0.0
    %145 = vmatpush.xpose.msra.mxu0 0.0
    %146 = vmatpush.xpose.msra.mxu0 0.0
    %147 = vmatpush.xpose.msra.mxu0 0.0
    %148 = vmatpush.xpose.msra.mxu0 0.0
    %149 = vmatpush.xpose.msra.mxu0 0.0
    %150 = vmatpush.xpose.msra.mxu0 0.0
    %151 = vmatpush.xpose.msra.mxu0 0.0
    %152 = vmatpush.xpose.msra.mxu0 0.0
    %153 = vmatpush.xpose.msra.mxu0 0.0
    %154 = vmatpush.xpose.msra.mxu0 %v137
    %155 = vmatmul.f32.gmra.mxu0 %v135
    %v156 = vpop.f32.mrf.mxu0
    %v157 = vadd.f32 0.0, %v156
    %158 = vdwg.mxu0
    %160 = vrot.lane.b32.xlu0 %v101, 80
    %v161 = vpop.permute.xlu0 %160
    %v162 = vsel %vm106, %v101, 0
    %v164 = vsel %vm106, %v161, 0
    %166 = vmatpush.xpose.msra.mxu0 0.0
    %167 = vmatpush.xpose.msra.mxu0 0.0
    %168 = vmatpush.xpose.msra.mxu0 0.0
    %169 = vmatpush.xpose.msra.mxu0 0.0
    %170 = vmatpush.xpose.msra.mxu0 0.0
    %171 = vmatpush.xpose.msra.mxu0 0.0
    %172 = vmatpush.xpose.msra.mxu0 0.0
    %173 = vmatpush.xpose.msra.mxu0 0.0
    %174 = vmatpush.xpose.msra.mxu0 0.0
    %175 = vmatpush.xpose.msra.mxu0 0.0
    %176 = vmatpush.xpose.msra.mxu0 0.0
    %177 = vmatpush.xpose.msra.mxu0 0.0
    %178 = vmatpush.xpose.msra.mxu0 0.0
    %179 = vmatpush.xpose.msra.mxu0 0.0
    %180 = vmatpush.xpose.msra.mxu0 0.0
    %181 = vmatpush.xpose.msra.mxu0 %v164
    %182 = vmatmul.f32.gmra.mxu0 %v162
    %v183 = vpop.f32.mrf.mxu0
    %v184 = vadd.f32 0.0, %v183
    %185 = vdwg.mxu0
    %186 = vrot.lane.b32.xlu0 %v101, 104
    %v187 = vpop.permute.xlu0 %186
    %188 = vrot.lane.b32.xlu0 %v101, 56
    %v189 = vpop.permute.xlu0 %188
    %v190 = vsel %vm106, %v187, 0
    %v192 = vsel %vm106, %v189, 0
    %194 = vmatpush.xpose.msra.mxu0 0.0
    %195 = vmatpush.xpose.msra.mxu0 0.0
    %196 = vmatpush.xpose.msra.mxu0 0.0
    %197 = vmatpush.xpose.msra.mxu0 0.0
    %198 = vmatpush.xpose.msra.mxu0 0.0
    %199 = vmatpush.xpose.msra.mxu0 0.0
    %200 = vmatpush.xpose.msra.mxu0 0.0
    %201 = vmatpush.xpose.msra.mxu0 0.0
    %202 = vmatpush.xpose.msra.mxu0 0.0
    %203 = vmatpush.xpose.msra.mxu0 0.0
    %204 = vmatpush.xpose.msra.mxu0 0.0
    %205 = vmatpush.xpose.msra.mxu0 0.0
    %206 = vmatpush.xpose.msra.mxu0 0.0
    %207 = vmatpush.xpose.msra.mxu0 0.0
    %208 = vmatpush.xpose.msra.mxu0 0.0
    %209 = vmatpush.xpose.msra.mxu0 %v192
    %210 = vmatmul.f32.gmra.mxu0 %v190
    %v211 = vpop.f32.mrf.mxu0
    %v212 = vadd.f32 0.0, %v211
    %213 = vdwg.mxu0
    %v214 = vmul.f32 %v129, 0.35355338
    %v215 = vmul.f32 %v157, 0.35355338
    %v216 = vmul.f32 %v184, 0.35355338
    %v217 = vmul.f32 %v212, 0.35355338
    %vm218 = vcmask 64512
    %v219 = vsel %vm218, %v214, -inf
    %220 = vmax.xlane.f32.xlu0 %v219
    %v221 = vpop.xlane.xlu0 %220
    %v222 = vsel %vm218, %v215, -inf
    %223 = vmax.xlane.f32.xlu0 %v222
    %v224 = vpop.xlane.xlu0 %223
    %v225 = vsel %vm218, %v216, -inf
    %226 = vmax.xlane.f32.xlu0 %v225
    %v227 = vpop.xlane.xlu0 %226
    %v228 = vsel %vm218, %v217, -inf
    %229 = vmax.xlane.f32.xlu0 %v228
    %v230 = vpop.xlane.xlu0 %229
    %v231 = vsub.f32 %v214, %v221
    %v232 = vsub.f32 %v215, %v224
    %v233 = vsub.f32 %v216, %v227
    %v234 = vsub.f32 %v217, %v230
    %v235 = vmul.f32 %v231, 1.442695
    %v236 = vpow.pop %v235
    %v237 = vmul.f32 %v232, 1.442695
    %v238 = vpow.pop %v237
    %v239 = vmul.f32 %v233, 1.442695
    %v240 = vpow.pop %v239
    %v241 = vmul.f32 %v234, 1.442695
    %v242 = vpow.pop %v241
    %v243 = vsel %vm218, %v236, 0.0
    %244 = vadd.xlane.f32.xlu0 %v243
    %v245 = vpop.xlane.xlu0 %244
    %v246 = vsel %vm218, %v238, 0.0
    %247 = vadd.xlane.f32.xlu0 %v246
    %v248 = vpop.xlane.xlu0 %247
    %v249 = vsel %vm218, %v240, 0.0
    %250 = vadd.xlane.f32.xlu0 %v249
    %v251 = vpop.xlane.xlu0 %250
    %v252 = vsel %vm218, %v242, 0.0
    %253 = vadd.xlane.f32.xlu0 %v252
    %v254 = vpop.xlane.xlu0 %253
    %v255 = vrcp.pop %v245
    %v256 = vmul.f32 %v245, %v255
    %v257 = vsub.f32 1.0, %v256
    %v258 = vmul.f32 %v255, %v257
    %v259 = vadd.f32 %v255, %v258
    %vm260 = vweird.f32 %v245
    %vm261 = vweird.f32 %v255
    %vm262 = vmor %vm260, %vm261
    %v263 = vsel %vm262, %v255, %v259
    %v264 = vand.u32 2147483647, %v245
    %vm265 = vcmp.eq.f32.partialorder %v264, 8.507059e+37
    %v266 = vand.u32 %v245, 2147483648
    %v267 = vor.u32 1.1754944e-38, %v266
    %v268 = vsel %vm265, %v267, %v263
    %v269 = vrcp.pop %v248
    %v270 = vmul.f32 %v248, %v269
    %v271 = vsub.f32 1.0, %v270
    %v272 = vmul.f32 %v269, %v271
    %v273 = vadd.f32 %v269, %v272
    %vm274 = vweird.f32 %v248
    %vm275 = vweird.f32 %v269
    %vm276 = vmor %vm274, %vm275
    %v277 = vsel %vm276, %v269, %v273
    %v278 = vand.u32 2147483647, %v248
    %vm279 = vcmp.eq.f32.partialorder %v278, 8.507059e+37
    %v280 = vand.u32 %v248, 2147483648
    %v281 = vor.u32 1.1754944e-38, %v280
    %v282 = vsel %vm279, %v281, %v277
    %v283 = vrcp.pop %v251
    %v284 = vmul.f32 %v251, %v283
    %v285 = vsub.f32 1.0, %v284
    %v286 = vmul.f32 %v283, %v285
    %v287 = vadd.f32 %v283, %v286
    %vm288 = vweird.f32 %v251
    %vm289 = vweird.f32 %v283
    %vm290 = vmor %vm288, %vm289
    %v291 = vsel %vm290, %v283, %v287
    %v292 = vand.u32 2147483647, %v251
    %vm293 = vcmp.eq.f32.partialorder %v292, 8.507059e+37
    %v294 = vand.u32 %v251, 2147483648
    %v295 = vor.u32 1.1754944e-38, %v294
    %v296 = vsel %vm293, %v295, %v291
    %v297 = vrcp.pop %v254
    %v298 = vmul.f32 %v254, %v297
    %v299 = vsub.f32 1.0, %v298
    %v300 = vmul.f32 %v297, %v299
    %v301 = vadd.f32 %v297, %v300
    %vm302 = vweird.f32 %v254
    %vm303 = vweird.f32 %v297
    %vm304 = vmor %vm302, %vm303
    %v305 = vsel %vm304, %v297, %v301
    %v306 = vand.u32 2147483647, %v254
    %vm307 = vcmp.eq.f32.partialorder %v306, 8.507059e+37
    %v308 = vand.u32 %v254, 2147483648
    %v309 = vor.u32 1.1754944e-38, %v308
    %v310 = vsel %vm307, %v309, %v305
    %v311 = vmul.f32 %v236, %v268
    %v312 = vmul.f32 %v238, %v282
    %v313 = vmul.f32 %v240, %v296
    %v314 = vmul.f32 %v242, %v310
    %315 = vrot.lane.b32.xlu0 %v98, 32
    %v316 = vpop.permute.xlu0 %315
    %v319 = vsel %vm218, %v311, 0
    %321 = vmatpush.msra.mxu0 0.0
    %322 = vmatpush.msra.mxu0 0.0
    %323 = vmatpush.msra.mxu0 0.0
    %324 = vmatpush.msra.mxu0 0.0
    %325 = vmatpush.msra.mxu0 0.0
    %326 = vmatpush.msra.mxu0 0.0
    %327 = vmatpush.msra.mxu0 0.0
    %328 = vmatpush.msra.mxu0 0.0
    %329 = vmatpush.msra.mxu0 0.0
    %330 = vmatpush.msra.mxu0 0.0
    %331 = vmatpush.msra.mxu0 0.0
    %332 = vmatpush.msra.mxu0 0.0
    %333 = vmatpush.msra.mxu0 0.0
    %334 = vmatpush.msra.mxu0 0.0
    %335 = vmatpush.msra.mxu0 0.0
    %336 = vmatpush.msra.mxu0 %v316
    %337 = vmatmul.f32.gmra.mxu0 %v319
    %v338 = vpop.f32.mrf.mxu0
    %v339 = vadd.f32 0.0, %v338
    %340 = vdwg.mxu0
    %341 = vrot.lane.b32.xlu0 %v98, 24
    %v342 = vpop.permute.xlu0 %341
    %v345 = vsel %vm218, %v312, 0
    %347 = vmatpush.msra.mxu0 0.0
    %348 = vmatpush.msra.mxu0 0.0
    %349 = vmatpush.msra.mxu0 0.0
    %350 = vmatpush.msra.mxu0 0.0
    %351 = vmatpush.msra.mxu0 0.0
    %352 = vmatpush.msra.mxu0 0.0
    %353 = vmatpush.msra.mxu0 0.0
    %354 = vmatpush.msra.mxu0 0.0
    %355 = vmatpush.msra.mxu0 0.0
    %356 = vmatpush.msra.mxu0 0.0
    %357 = vmatpush.msra.mxu0 0.0
    %358 = vmatpush.msra.mxu0 0.0
    %359 = vmatpush.msra.mxu0 0.0
    %360 = vmatpush.msra.mxu0 0.0
    %361 = vmatpush.msra.mxu0 0.0
    %362 = vmatpush.msra.mxu0 %v342
    %363 = vmatmul.f32.gmra.mxu0 %v345
    %v364 = vpop.f32.mrf.mxu0
    %v365 = vadd.f32 0.0, %v364
    %366 = vdwg.mxu0
    %368 = vrot.lane.b32.xlu0 %v365, 8
    %v369 = vpop.permute.xlu0 %368
    %v371 = vsel %vm218, %v339, %v369
    %372 = vrot.lane.b32.xlu0 %v101, 32
    %v373 = vpop.permute.xlu0 %372
    %v376 = vsel %vm218, %v313, 0
    %378 = vmatpush.msra.mxu0 0.0
    %379 = vmatpush.msra.mxu0 0.0
    %380 = vmatpush.msra.mxu0 0.0
    %381 = vmatpush.msra.mxu0 0.0
    %382 = vmatpush.msra.mxu0 0.0
    %383 = vmatpush.msra.mxu0 0.0
    %384 = vmatpush.msra.mxu0 0.0
    %385 = vmatpush.msra.mxu0 0.0
    %386 = vmatpush.msra.mxu0 0.0
    %387 = vmatpush.msra.mxu0 0.0
    %388 = vmatpush.msra.mxu0 0.0
    %389 = vmatpush.msra.mxu0 0.0
    %390 = vmatpush.msra.mxu0 0.0
    %391 = vmatpush.msra.mxu0 0.0
    %392 = vmatpush.msra.mxu0 0.0
    %393 = vmatpush.msra.mxu0 %v373
    %394 = vmatmul.f32.gmra.mxu0 %v376
    %v395 = vpop.f32.mrf.mxu0
    %v396 = vadd.f32 0.0, %v395
    %397 = vdwg.mxu0
    %398 = vrot.lane.b32.xlu0 %v101, 24
    %v399 = vpop.permute.xlu0 %398
    %v402 = vsel %vm218, %v314, 0
    %404 = vmatpush.msra.mxu0 0.0
    %405 = vmatpush.msra.mxu0 0.0
    %406 = vmatpush.msra.mxu0 0.0
    %407 = vmatpush.msra.mxu0 0.0
    %408 = vmatpush.msra.mxu0 0.0
    %409 = vmatpush.msra.mxu0 0.0
    %410 = vmatpush.msra.mxu0 0.0
    %411 = vmatpush.msra.mxu0 0.0
    %412 = vmatpush.msra.mxu0 0.0
    %413 = vmatpush.msra.mxu0 0.0
    %414 = vmatpush.msra.mxu0 0.0
    %415 = vmatpush.msra.mxu0 0.0
    %416 = vmatpush.msra.mxu0 0.0
    %417 = vmatpush.msra.mxu0 0.0
    %418 = vmatpush.msra.mxu0 0.0
    %419 = vmatpush.msra.mxu0 %v399
    %420 = vmatmul.f32.gmra.mxu0 %v402
    %v421 = vpop.f32.mrf.mxu0
    %v422 = vadd.f32 0.0, %v421
    %423 = vdwg.mxu0
    %425 = vrot.lane.b32.xlu0 %v422, 8
    %v426 = vpop.permute.xlu0 %425
    %v428 = vsel %vm218, %v396, %v426
    %v429 = vld [vmem:[%s2] sm:$0xff]
    %v430 = vld [vmem:[%s2 + $0x8] sm:$0xff]
    %v431 = vperm.slane %v18, 0
    %vm432 = vcmask 130048
    %v434 = vsel %vm432, %v371, 0
    %v437 = vsel %vm432, %v428, 0
    %439 = vmatpush.msra.mxu0 0.0
    %440 = vmatpush.msra.mxu0 0.0
    %441 = vmatpush.msra.mxu0 0.0
    %442 = vmatpush.msra.mxu0 0.0
    %443 = vmatpush.msra.mxu0 0.0
    %444 = vmatpush.msra.mxu0 0.0
    %445 = vmatpush.msra.mxu0 0.0
    %446 = vmatpush.msra.mxu0 0.0
    %447 = vmatpush.msra.mxu0 0.0
    %448 = vmatpush.msra.mxu0 0.0
    %449 = vmatpush.msra.mxu0 0.0
    %450 = vmatpush.msra.mxu0 0.0
    %451 = vmatpush.msra.mxu0 0.0
    %452 = vmatpush.msra.mxu0 0.0
    %453 = vmatpush.msra.mxu0 %v430
    %454 = vmatpush.msra.mxu0 %v429
    %455 = vmatmul.f32.gmra.mxu0 %v434
    %v456 = vpop.f32.mrf.mxu0
    %v457 = vadd.f32 %v431, %v456
    %458 = vmatmul.f32.gmra.mxu0 %v437
    %v459 = vpop.f32.mrf.mxu0
    %v460 = vadd.f32 %v431, %v459
    %461 = vdwg.mxu0
    %v462 = vadd.f32 %v457, %v21
    %v463 = vadd.f32 %v460, %v23
    %vm464 = vcmask 261120
    %v465 = vsel %vm464, %v462, 0.0
    %466 = vadd.xlane.f32.xlu0 %v465
    %v467 = vpop.xlane.xlu0 %466
    %v468 = vsel %vm464, %v463, 0.0
    %469 = vadd.xlane.f32.xlu0 %v468
    %v470 = vpop.xlane.xlu0 %469
    %v471 = vrcp.pop 32.0
    %v472 = vmul.f32 32.0, %v471
    %v473 = vsub.f32 1.0, %v472
    %v474 = vmul.f32 %v471, %v473
    %v475 = vadd.f32 %v471, %v474
    %vm476 = vweird.f32 %v471
    %v477 = vsel %vm476, %v471, %v475
    %v478 = vmul.f32 %v467, %v477
    %v479 = vmul.f32 %v470, %v477
    %v480 = vsub.f32 %v462, %v478
    %v481 = vsub.f32 %v463, %v479
    %v482 = vmul.f32 %v480, %v480
    %v483 = vmul.f32 %v481, %v481
    %v484 = vsel %vm464, %v482, 0.0
    %485 = vadd.xlane.f32.xlu0 %v484
    %v486 = vpop.xlane.xlu0 %485
    %v487 = vsel %vm464, %v483, 0.0
    %488 = vadd.xlane.f32.xlu0 %v487
    %v489 = vpop.xlane.xlu0 %488
    %v490 = vmul.f32 %v486, %v477
    %v491 = vmul.f32 %v489, %v477
    %v492 = vadd.f32 %v490, 1e-05
    %v493 = vadd.f32 %v491, 1e-05
    %v494 = vrsqrt.pop %v492
    %v495 = vmul.f32 %v494, %v492
    %v496 = vmul.f32 %v495, %v494
    %v497 = vmul.f32 0.5, %v496
    %v498 = vsub.f32 1.5, %v497
    %v499 = vmul.f32 %v494, %v498
    %vm500 = vweird.f32 %v492
    %vm501 = vweird.f32 %v494
    %vm502 = vmor %vm500, %vm501
    %v503 = vsel %vm502, %v494, %v499
    %v504 = vrsqrt.pop %v493
    %v505 = vmul.f32 %v504, %v493
    %v506 = vmul.f32 %v505, %v504
    %v507 = vmul.f32 0.5, %v506
    %v508 = vsub.f32 1.5, %v507
    %v509 = vmul.f32 %v504, %v508
    %vm510 = vweird.f32 %v493
    %vm511 = vweird.f32 %v504
    %vm512 = vmor %vm510, %vm511
    %v513 = vsel %vm512, %v504, %v509
    %v514 = vmul.f32 %v480, %v503
    %v515 = vmul.f32 %v481, %v513
    %v516 = vperm.slane %v19, 0
    %v517 = vmul.f32 %v514, %v516
    %v518 = vmul.f32 %v515, %v516
    %v519 = vperm.slane %v20, 0
    %v520 = vadd.f32 %v517, %v519
    %v521 = vadd.f32 %v518, %v519
    %522 = vst.msk [vmem:[#allocation2] sm:$0xff] %vm464, %v520
    %523 = vst.msk [vmem:[#allocation2 + $0x8] sm:$0xff] %vm464, %v521
    // Predicated region
    $region18: #{mix_attention.1} parent=1 // pred_check
      _
    $region19: #{mix_attention.1} parent=1 // pred_check_branch
      %525 = sbr.rel (0) target = $region21
    $region20: #{mix_attention.1} parent=1 // pred_region
      %527 = vsyncadd [#allocation3], 0
      %s528 = sshll.u32 [#allocation2], 4
      %s529 = int_to_ptr.vmem [resolvable:$true] %s528
      %s530 = sshll.u32 %s4, 4
      %s531 = int_to_ptr.hbm [resolvable:$true] %s530
      %536 = dma.vmem_to_hbm [thread:$0]  %s529, 256, %s531, [#allocation3], 128, 128, 8
    $region21: #{mix_attention.1} parent=1 // pred_fallthru
      _
    // Predicated region
    $region22: #{mix_attention.1} parent=1 // pred_check
      _
    $region23: #{mix_attention.1} parent=1 // pred_check_branch
      %538 = sbr.rel (0) target = $region25
    $region24: #{mix_attention.1} parent=1 // pred_region
      %540 = dma.done [#allocation3], 256
    $region25: #{mix_attention.1} parent=1 // pred_fallthru
      _
    %541 = vsyncpa [#allocation3], 1

</llo_original>
